<compile_context>
chip_gen: v7x
topology: tpu7x:2x2x1
jax: 0.10.0
libtpu: 0.0.40
codegen_flags: <defaults>
</compile_context>

<pallas_src>
from functools import partial

import jax
import jax.numpy as jnp
from jax.experimental import pallas as pl
from jax.experimental.pallas import tpu as pltpu

_GROUP = 32            # samples packed per 128-lane row (4 features each)
_TR_MAX = 2048         # max rows per grid step (= 65536 samples, ~1.75 MiB/step)


def _round_up(n, m):
    return ((n + m - 1) // m) * m


def _mlp_kernel(bd1_ref, b1_ref, bd2_ref, b2_ref, x_ref, o_ref):
    """One batch tile.

    bd1_ref : (128, 128) block-diag kron(I32, W1^T)   -- VMEM-resident
    b1_ref  : (1, 128)   b1 tiled 32x (f32)
    bd2_ref : (128, 96)  block-diag kron(I32, W2^T)   -- VMEM-resident
    b2_ref  : (1, 96)    b2 tiled 32x (f32)
    x_ref   : (TR, 128)  32 samples x 4 features per row (lane-dense)
    o_ref   : (TR, 96)   32 samples x 3 outputs per row
    """
    cdt = bd1_ref.dtype                      # matmul operand dtype (f32 or bf16)
    x = x_ref[...].astype(cdt)

    # fc1 + ReLU (K = 128 contraction; only the diagonal 4x4 blocks are nonzero)
    h = jnp.dot(x, bd1_ref[...], preferred_element_type=jnp.float32) + b1_ref[...]
    h = jnp.maximum(h, 0.0)

    # fc2
    y = jnp.dot(h.astype(cdt), bd2_ref[...],
                preferred_element_type=jnp.float32) + b2_ref[...]
    o_ref[...] = y.astype(o_ref.dtype)


@partial(jax.jit, static_argnames=("matmul_dtype",))
def net_forward(x, w1, b1, w2, b2, *, matmul_dtype=jnp.float32):
    """Forward pass of `Net`.

    x  : (B, 4) float32
    w1 : (4, 4) float32, PyTorch convention (out_features, in_features)
    b1 : (4,)   float32
    w2 : (3, 4) float32, PyTorch convention
    b2 : (3,)   float32
    matmul_dtype : dtype for the MXU operands (jnp.bfloat16 recommended on v5e).
    returns (B, 3) float32
    """
    B = x.shape[0]
    x = x.astype(jnp.float32)

    # Pad batch to a multiple of 32 only when needed (otherwise the reshape
    # below is completely free -- no data movement).
    Bp = _round_up(max(B, 1), _GROUP)
    if Bp != B:
        x = jnp.pad(x, ((0, Bp - B), (0, 0)))
    R = Bp // _GROUP
    xr = x.reshape(R, 128)                   # free row-major view, lane-dense

    # Tile the row axis: big tiles to amortise per-step overhead, but at least
    # 2 tiles whenever there is enough work so v7x can use both TensorCores.
    ntiles = pl.cdiv(R, _TR_MAX)
    if ntiles == 1 and R >= 16:
        ntiles = 2
    if ntiles > 1:
        tr = _round_up(pl.cdiv(R, ntiles), 8)   # sublane-aligned tile
        ntiles = pl.cdiv(R, tr)                 # ragged last tile is masked
    else:
        tr = R                                   # single tile == full array

    # Block-diagonal weights + lane-tiled biases (tiny; DMA'd once, resident).
    eye = jnp.eye(_GROUP, dtype=jnp.float32)
    bd1 = jnp.kron(eye, w1.T.astype(jnp.float32)).astype(matmul_dtype)  # (128,128)
    bd2 = jnp.kron(eye, w2.T.astype(jnp.float32)).astype(matmul_dtype)  # (128, 96)
    b1t = jnp.tile(b1.astype(jnp.float32), _GROUP)[None, :]             # (1, 128)
    b2t = jnp.tile(b2.astype(jnp.float32), _GROUP)[None, :]             # (1, 96)

    out = pl.pallas_call(
        _mlp_kernel,
        out_shape=jax.ShapeDtypeStruct((R, 96), jnp.float32),
        grid=(ntiles,),
        in_specs=[
            pl.BlockSpec((128, 128), lambda i: (0, 0)),   # bd1: resident
            pl.BlockSpec((1, 128),   lambda i: (0, 0)),   # b1 : resident
            pl.BlockSpec((128, 96),  lambda i: (0, 0)),   # bd2: resident
            pl.BlockSpec((1, 96),    lambda i: (0, 0)),   # b2 : resident
            pl.BlockSpec((tr, 128),  lambda i: (i, 0)),   # x batch tile
        ],
        out_specs=pl.BlockSpec((tr, 96), lambda i: (i, 0)),
        compiler_params=pltpu.CompilerParams(
            dimension_semantics=("parallel",)),
    )(bd1, b1t, bd2, b2t, xr)

    y = out.reshape(Bp, 3)                    # free row-major view back to (B, 3)
    return y[:B] if Bp != B else y


def _reference(x, w1, b1, w2, b2):
    h = jnp.maximum(x @ w1.T + b1, 0.0)
    return h @ w2.T + b2


if __name__ == "__main__":
    key = jax.random.PRNGKey(0)
    kx, k1, k2, k3, k4 = jax.random.split(key, 5)

    # Deterministic parameters (PyTorch convention: weight is (out, in)).
    w1 = jax.random.normal(k1, (4, 4), dtype=jnp.float32) * 0.5
    b1 = jax.random.normal(k2, (4,), dtype=jnp.float32) * 0.1
    w2 = jax.random.normal(k3, (3, 4), dtype=jnp.float32) * 0.5
    b2 = jax.random.normal(k4, (3,), dtype=jnp.float32) * 0.1

    # Small case consistent with fc1 = nn.Linear(4, 4): features = 4.
    batch = 8
    x = jax.random.normal(kx, (batch, 4), dtype=jnp.float32)
    out = jax.block_until_ready(net_forward(x, w1, b1, w2, b2))
    assert out.shape == (batch, 3)
    assert jnp.allclose(out, _reference(x, w1, b1, w2, b2), atol=1e-5, rtol=1e-5)

    # Non-multiple-of-32 batch: exercises the pad path + multi-tile ragged grid.
    x2 = jax.random.normal(jax.random.PRNGKey(1), (3000, 4), dtype=jnp.float32)
    out2 = jax.block_until_ready(net_forward(x2, w1, b1, w2, b2))
    assert out2.shape == (3000, 3)
    assert jnp.allclose(out2, _reference(x2, w1, b1, w2, b2), atol=1e-5, rtol=1e-5)

    # Multiple-of-32 batch: the zero-copy (free reshape) path, exact tile split.
    x3 = jax.random.normal(jax.random.PRNGKey(2), (4096, 4), dtype=jnp.float32)
    out3 = jax.block_until_ready(net_forward(x3, w1, b1, w2, b2))
    assert out3.shape == (4096, 3)
    assert jnp.allclose(out3, _reference(x3, w1, b1, w2, b2), atol=1e-5, rtol=1e-5)

    # Optional v5e path: bf16 MXU operands, f32 accumulation (looser tolerance).
    out3_bf = jax.block_until_ready(
        net_forward(x3, w1, b1, w2, b2, matmul_dtype=jnp.bfloat16))
    assert jnp.allclose(out3_bf, _reference(x3, w1, b1, w2, b2),
                        atol=1e-1, rtol=5e-2)

    print("KERNEL_OK")
</pallas_src>

<mosaic_0001>
module attributes {stable_mosaic.version = 11 : i64} {
  func.func @_mlp_kernel(%arg0: i32, %arg1: memref<128x128xf32, #tpu.memory_space<vmem>>, %arg2: memref<1x128xf32, #tpu.memory_space<vmem>>, %arg3: memref<128x96xf32, #tpu.memory_space<vmem>>, %arg4: memref<1x96xf32, #tpu.memory_space<vmem>>, %arg5: memref<1x128xf32, #tpu.memory_space<vmem>>, %arg6: memref<1x96xf32, #tpu.memory_space<vmem>>) attributes {dimension_semantics = [#tpu.dimension_semantics<parallel>], iteration_bounds = array<i64: 1>, scalar_prefetch = 0 : i64, scratch_operands = 0 : i64, tpu.core_type = #tpu.core_type<tc>, window_params = [{pipeline_mode = #tpu.pipeline_mode<synchronous>, transform_indices = @transform_0, window_bounds = array<i64: 128, 128>}, {pipeline_mode = #tpu.pipeline_mode<synchronous>, transform_indices = @transform_1, window_bounds = array<i64: 1, 128>}, {pipeline_mode = #tpu.pipeline_mode<synchronous>, transform_indices = @transform_2, window_bounds = array<i64: 128, 96>}, {pipeline_mode = #tpu.pipeline_mode<synchronous>, transform_indices = @transform_3, window_bounds = array<i64: 1, 96>}, {transform_indices = @transform_4, window_bounds = array<i64: 1, 128>}, {transform_indices = @transform_5, window_bounds = array<i64: 1, 96>}]} {
    %c0 = arith.constant 0 : index
    %c0_0 = arith.constant 0 : index
    %0 = vector.load %arg5[%c0, %c0_0] : memref<1x128xf32, #tpu.memory_space<vmem>>, vector<1x128xf32>
    %c0_1 = arith.constant 0 : index
    %c0_2 = arith.constant 0 : index
    %1 = vector.load %arg1[%c0_1, %c0_2] : memref<128x128xf32, #tpu.memory_space<vmem>>, vector<128x128xf32>
    %cst = arith.constant dense<0.000000e+00> : vector<1x128xf32>
    %2 = tpu.matmul %0, %1, %cst {dimension_numbers = #tpu.dot_dimension_numbers<[1], [0], [0], [1], [0, 0, 1, 1], [], []>} : vector<1x128xf32>, vector<128x128xf32>, vector<1x128xf32> -> vector<1x128xf32>
    %c0_3 = arith.constant 0 : index
    %c0_4 = arith.constant 0 : index
    %3 = vector.load %arg2[%c0_3, %c0_4] : memref<1x128xf32, #tpu.memory_space<vmem>>, vector<1x128xf32>
    %4 = arith.addf %2, %3 : vector<1x128xf32>
    %cst_5 = arith.constant 0.000000e+00 : f32
    %5 = vector.broadcast %cst_5 : f32 to vector<1x128xf32>
    %6 = arith.maximumf %4, %5 : vector<1x128xf32>
    %c0_6 = arith.constant 0 : index
    %c0_7 = arith.constant 0 : index
    %7 = vector.load %arg3[%c0_6, %c0_7] : memref<128x96xf32, #tpu.memory_space<vmem>>, vector<128x96xf32>
    %cst_8 = arith.constant dense<0.000000e+00> : vector<1x96xf32>
    %8 = tpu.matmul %6, %7, %cst_8 {dimension_numbers = #tpu.dot_dimension_numbers<[1], [0], [0], [1], [0, 0, 1, 1], [], []>} : vector<1x128xf32>, vector<128x96xf32>, vector<1x96xf32> -> vector<1x96xf32>
    %c0_9 = arith.constant 0 : index
    %c0_10 = arith.constant 0 : index
    %9 = vector.load %arg4[%c0_9, %c0_10] : memref<1x96xf32, #tpu.memory_space<vmem>>, vector<1x96xf32>
    %10 = arith.addf %8, %9 : vector<1x96xf32>
    %c0_11 = arith.constant 0 : index
    %c0_12 = arith.constant 0 : index
    %11 = vector.load %arg6[%c0_11, %c0_12] : memref<1x96xf32, #tpu.memory_space<vmem>>, vector<1x96xf32>
    tpu.vector_store %arg6[%c0_11, %c0_12], %10 {strides = array<i32>} : memref<1x96xf32, #tpu.memory_space<vmem>>, vector<1x96xf32>,
    return
  }
  func.func @transform_0(%arg0: i32) -> (i32, i32) {
    %c0_i32 = arith.constant 0 : i32
    %c0_i32_0 = arith.constant 0 : i32
    %c0_i32_1 = arith.constant 0 : i32
    return %c0_i32, %c0_i32_0 : i32, i32
  }
  func.func @transform_1(%arg0: i32) -> (i32, i32) {
    %c0_i32 = arith.constant 0 : i32
    %c0_i32_0 = arith.constant 0 : i32
    %c0_i32_1 = arith.constant 0 : i32
    return %c0_i32, %c0_i32_0 : i32, i32
  }
  func.func @transform_2(%arg0: i32) -> (i32, i32) {
    %c0_i32 = arith.constant 0 : i32
    %c0_i32_0 = arith.constant 0 : i32
    %c0_i32_1 = arith.constant 0 : i32
    return %c0_i32, %c0_i32_0 : i32, i32
  }
  func.func @transform_3(%arg0: i32) -> (i32, i32) {
    %c0_i32 = arith.constant 0 : i32
    %c0_i32_0 = arith.constant 0 : i32
    %c0_i32_1 = arith.constant 0 : i32
    return %c0_i32, %c0_i32_0 : i32, i32
  }
  func.func @transform_4(%arg0: i32) -> (i32, i32) {
    %c0_i32 = arith.constant 0 : i32
    %c0_i32_0 = arith.constant 0 : i32
    return %arg0, %c0_i32 : i32, i32
  }
  func.func @transform_5(%arg0: i32) -> (i32, i32) {
    %c0_i32 = arith.constant 0 : i32
    %c0_i32_0 = arith.constant 0 : i32
    return %arg0, %c0_i32 : i32, i32
  }
}

</mosaic_0001>

<llo_original>
// kernel: tile.13
$region0: #{tile.13}
  #allocation0 [shape = 's32[1]{0}', space=sflag, size = 0x4, scoped, tag = 'scoped memory for tile.13']
  %s0 = inlined_call_operand.vmem [shape: f32[4], index: 0, kind: input, shape index: {}]
  %s1 = inlined_call_operand.vmem [shape: f32[32,4], index: 1, kind: output, shape index: {}]
  // Predicated region
  $region2: #{tile.13} parent=0 // pred_check
    _
  $region3: #{tile.13} parent=0 // pred_check_branch
    %3 = sbr.rel (0) target = $region5
  $region4: #{tile.13} parent=0 // pred_region
    _
  $region5: #{tile.13} parent=0 // pred_fallthru
    _
  %v4 = vld [vmem:[%s0] ss:$0 sm:$0xff]
  %5 = vst [vmem:[%s1] sm:$0xff] %v4
  %s6 = scalar_lea.vmem %s1, 8
  %7 = vst [vmem:[%s6] sm:$0xff] %v4
  %s8 = scalar_lea.vmem %s1, 16
  %9 = vst [vmem:[%s8] sm:$0xff] %v4
  %s10 = scalar_lea.vmem %s1, 24
  %11 = vst [vmem:[%s10] sm:$0xff] %v4

// kernel: tile.18
$region0: #{tile.18}
  #allocation0 [shape = 's32[1]{0}', space=sflag, size = 0x4, scoped, tag = 'scoped memory for tile.18']
  %s0 = inlined_call_operand.vmem [shape: f32[3], index: 0, kind: input, shape index: {}]
  %s1 = inlined_call_operand.vmem [shape: f32[32,3], index: 1, kind: output, shape index: {}]
  // Predicated region
  $region2: #{tile.18} parent=0 // pred_check
    _
  $region3: #{tile.18} parent=0 // pred_check_branch
    %3 = sbr.rel (0) target = $region5
  $region4: #{tile.18} parent=0 // pred_region
    _
  $region5: #{tile.18} parent=0 // pred_fallthru
    _
  %v4 = vld [vmem:[%s0] ss:$0 sm:$0xff]
  %5 = vst [vmem:[%s1] sm:$0xff] %v4
  %s6 = scalar_lea.vmem %s1, 8
  %7 = vst [vmem:[%s6] sm:$0xff] %v4
  %s8 = scalar_lea.vmem %s1, 16
  %9 = vst [vmem:[%s8] sm:$0xff] %v4
  %s10 = scalar_lea.vmem %s1, 24
  %11 = vst [vmem:[%s10] sm:$0xff] %v4

// kernel: tile.19
$region0: #{tile.19}
  %s0 = inlined_call_operand.vmem [shape: f32[32,3], index: 0, kind: input, shape index: {}]
  %s1 = inlined_call_operand.vmem [shape: f32[1,96], index: 1, kind: output, shape index: {}]
  $region1: #{tile.19} parent=0
    #allocation0 [shape = 'u8[4096]{0}', space=vmem, size = 0x1000, scoped, tag = 'scoped mem for output reshape']
    %v2 = vld [vmem:[%s0] sm:$0x1]
    %vm3 = vcmask 23552
    %4 = vst.msk [vmem:[#allocation0] sm:$0x1] %vm3, %v2
    %s5 = scalar_lea.vmem %s0, 31
    %v6 = vld [vmem:[%s5] sm:$0x1]
    %7 = vrot.lane.b32.xlu0 %v6, 93
    %v8 = vpop.permute.xlu0 %7
    %vm9 = vcmask 786152
    %10 = vst.msk [vmem:[#allocation0] sm:$0x1] %vm9, %v8
    %s11 = scalar_lea.vmem %s0, 30
    %v12 = vld [vmem:[%s11] sm:$0x1]
    %13 = vrot.lane.b32.xlu0 %v12, 90
    %v14 = vpop.permute.xlu0 %13
    %vm15 = vcmask 761552
    %16 = vst.msk [vmem:[#allocation0] sm:$0x1] %vm15, %v14
    %s17 = scalar_lea.vmem %s0, 29
    %v18 = vld [vmem:[%s17] sm:$0x1]
    %19 = vrot.lane.b32.xlu0 %v18, 87
    %v20 = vpop.permute.xlu0 %19
    %vm21 = vcmask 736952
    %22 = vst.msk [vmem:[#allocation0] sm:$0x1] %vm21, %v20
    %s23 = scalar_lea.vmem %s0, 28
    %v24 = vld [vmem:[%s23] sm:$0x1]
    %25 = vrot.lane.b32.xlu0 %v24, 84
    %v26 = vpop.permute.xlu0 %25
    %vm27 = vcmask 712352
    %28 = vst.msk [vmem:[#allocation0] sm:$0x1] %vm27, %v26
    %s29 = scalar_lea.vmem %s0, 27
    %v30 = vld [vmem:[%s29] sm:$0x1]
    %31 = vrot.lane.b32.xlu0 %v30, 81
    %v32 = vpop.permute.xlu0 %31
    %vm33 = vcmask 687752
    %34 = vst.msk [vmem:[#allocation0] sm:$0x1] %vm33, %v32
    %s35 = scalar_lea.vmem %s0, 26
    %v36 = vld [vmem:[%s35] sm:$0x1]
    %37 = vrot.lane.b32.xlu0 %v36, 78
    %v38 = vpop.permute.xlu0 %37
    %vm39 = vcmask 663152
    %40 = vst.msk [vmem:[#allocation0] sm:$0x1] %vm39, %v38
    %s41 = scalar_lea.vmem %s0, 25
    %v42 = vld [vmem:[%s41] sm:$0x1]
    %43 = vrot.lane.b32.xlu0 %v42, 75
    %v44 = vpop.permute.xlu0 %43
    %vm45 = vcmask 638552
    %46 = vst.msk [vmem:[#allocation0] sm:$0x1] %vm45, %v44
    %s47 = scalar_lea.vmem %s0, 24
    %v48 = vld [vmem:[%s47] sm:$0x1]
    %49 = vrot.lane.b32.xlu0 %v48, 72
    %v50 = vpop.permute.xlu0 %49
    %vm51 = vcmask 613952
    %52 = vst.msk [vmem:[#allocation0] sm:$0x1] %vm51, %v50
    %s53 = scalar_lea.vmem %s0, 23
    %v54 = vld [vmem:[%s53] sm:$0x1]
    %55 = vrot.lane.b32.xlu0 %v54, 69
    %v56 = vpop.permute.xlu0 %55
    %vm57 = vcmask 589352
    %58 = vst.msk [vmem:[#allocation0] sm:$0x1] %vm57, %v56
    %s59 = scalar_lea.vmem %s0, 22
    %v60 = vld [vmem:[%s59] sm:$0x1]
    %61 = vrot.lane.b32.xlu0 %v60, 66
    %v62 = vpop.permute.xlu0 %61
    %vm63 = vcmask 564752
    %64 = vst.msk [vmem:[#allocation0] sm:$0x1] %vm63, %v62
    %s65 = scalar_lea.vmem %s0, 21
    %v66 = vld [vmem:[%s65] sm:$0x1]
    %67 = vrot.lane.b32.xlu0 %v66, 63
    %v68 = vpop.permute.xlu0 %67
    %vm69 = vcmask 540152
    %70 = vst.msk [vmem:[#allocation0] sm:$0x1] %vm69, %v68
    %s71 = scalar_lea.vmem %s0, 20
    %v72 = vld [vmem:[%s71] sm:$0x1]
    %73 = vrot.lane.b32.xlu0 %v72, 60
    %v74 = vpop.permute.xlu0 %73
    %vm75 = vcmask 515552
    %76 = vst.msk [vmem:[#allocation0] sm:$0x1] %vm75, %v74
    %s77 = scalar_lea.vmem %s0, 19
    %v78 = vld [vmem:[%s77] sm:$0x1]
    %79 = vrot.lane.b32.xlu0 %v78, 57
    %v80 = vpop.permute.xlu0 %79
    %vm81 = vcmask 490952
    %82 = vst.msk [vmem:[#allocation0] sm:$0x1] %vm81, %v80
    %s83 = scalar_lea.vmem %s0, 18
    %v84 = vld [vmem:[%s83] sm:$0x1]
    %85 = vrot.lane.b32.xlu0 %v84, 54
    %v86 = vpop.permute.xlu0 %85
    %vm87 = vcmask 466352
    %88 = vst.msk [vmem:[#allocation0] sm:$0x1] %vm87, %v86
    %s89 = scalar_lea.vmem %s0, 17
    %v90 = vld [vmem:[%s89] sm:$0x1]
    %91 = vrot.lane.b32.xlu0 %v90, 51
    %v92 = vpop.permute.xlu0 %91
    %vm93 = vcmask 441752
    %94 = vst.msk [vmem:[#allocation0] sm:$0x1] %vm93, %v92
    %s95 = scalar_lea.vmem %s0, 16
    %v96 = vld [vmem:[%s95] sm:$0x1]
    %97 = vrot.lane.b32.xlu0 %v96, 48
    %v98 = vpop.permute.xlu0 %97
    %vm99 = vcmask 417152
    %100 = vst.msk [vmem:[#allocation0] sm:$0x1] %vm99, %v98
    %s101 = scalar_lea.vmem %s0, 15
    %v102 = vld [vmem:[%s101] sm:$0x1]
    %103 = vrot.lane.b32.xlu0 %v102, 45
    %v104 = vpop.permute.xlu0 %103
    %vm105 = vcmask 392552
    %106 = vst.msk [vmem:[#allocation0] sm:$0x1] %vm105, %v104
    %s107 = scalar_lea.vmem %s0, 14
    %v108 = vld [vmem:[%s107] sm:$0x1]
    %109 = vrot.lane.b32.xlu0 %v108, 42
    %v110 = vpop.permute.xlu0 %109
    %vm111 = vcmask 367952
    %112 = vst.msk [vmem:[#allocation0] sm:$0x1] %vm111, %v110
    %s113 = scalar_lea.vmem %s0, 13
    %v114 = vld [vmem:[%s113] sm:$0x1]
    %115 = vrot.lane.b32.xlu0 %v114, 39
    %v116 = vpop.permute.xlu0 %115
    %vm117 = vcmask 343352
    %118 = vst.msk [vmem:[#allocation0] sm:$0x1] %vm117, %v116
    %s119 = scalar_lea.vmem %s0, 12
    %v120 = vld [vmem:[%s119] sm:$0x1]
    %121 = vrot.lane.b32.xlu0 %v120, 36
    %v122 = vpop.permute.xlu0 %121
    %vm123 = vcmask 318752
    %124 = vst.msk [vmem:[#allocation0] sm:$0x1] %vm123, %v122
    %s125 = scalar_lea.vmem %s0, 11
    %v126 = vld [vmem:[%s125] sm:$0x1]
    %127 = vrot.lane.b32.xlu0 %v126, 33
    %v128 = vpop.permute.xlu0 %127
    %vm129 = vcmask 294152
    %130 = vst.msk [vmem:[#allocation0] sm:$0x1] %vm129, %v128
    %s131 = scalar_lea.vmem %s0, 10
    %v132 = vld [vmem:[%s131] sm:$0x1]
    %133 = vrot.lane.b32.xlu0 %v132, 30
    %v134 = vpop.permute.xlu0 %133
    %vm135 = vcmask 269552
    %136 = vst.msk [vmem:[#allocation0] sm:$0x1] %vm135, %v134
    %s137 = scalar_lea.vmem %s0, 9
    %v138 = vld [vmem:[%s137] sm:$0x1]
    %139 = vrot.lane.b32.xlu0 %v138, 27
    %v140 = vpop.permute.xlu0 %139
    %vm141 = vcmask 244952
    %142 = vst.msk [vmem:[#allocation0] sm:$0x1] %vm141, %v140
    %s143 = scalar_lea.vmem %s0, 8
    %v144 = vld [vmem:[%s143] sm:$0x1]
    %145 = vrot.lane.b32.xlu0 %v144, 24
    %v146 = vpop.permute.xlu0 %145
    %vm147 = vcmask 220352
    %148 = vst.msk [vmem:[#allocation0] sm:$0x1] %vm147, %v146
    %s149 = scalar_lea.vmem %s0, 7
    %v150 = vld [vmem:[%s149] sm:$0x1]
    %151 = vrot.lane.b32.xlu0 %v150, 21
    %v152 = vpop.permute.xlu0 %151
    %vm153 = vcmask 195752
    %154 = vst.msk [vmem:[#allocation0] sm:$0x1] %vm153, %v152
    %s155 = scalar_lea.vmem %s0, 6
    %v156 = vld [vmem:[%s155] sm:$0x1]
    %157 = vrot.lane.b32.xlu0 %v156, 18
    %v158 = vpop.permute.xlu0 %157
    %vm159 = vcmask 171152
    %160 = vst.msk [vmem:[#allocation0] sm:$0x1] %vm159, %v158
    %s161 = scalar_lea.vmem %s0, 5
    %v162 = vld [vmem:[%s161] sm:$0x1]
    %163 = vrot.lane.b32.xlu0 %v162, 15
    %v164 = vpop.permute.xlu0 %163
    %vm165 = vcmask 146552
    %166 = vst.msk [vmem:[#allocation0] sm:$0x1] %vm165, %v164
    %s167 = scalar_lea.vmem %s0, 4
    %v168 = vld [vmem:[%s167] sm:$0x1]
    %169 = vrot.lane.b32.xlu0 %v168, 12
    %v170 = vpop.permute.xlu0 %169
    %vm171 = vcmask 121952
    %172 = vst.msk [vmem:[#allocation0] sm:$0x1] %vm171, %v170
    %s173 = scalar_lea.vmem %s0, 3
    %v174 = vld [vmem:[%s173] sm:$0x1]
    %175 = vrot.lane.b32.xlu0 %v174, 9
    %v176 = vpop.permute.xlu0 %175
    %vm177 = vcmask 97352
    %178 = vst.msk [vmem:[#allocation0] sm:$0x1] %vm177, %v176
    %s179 = scalar_lea.vmem %s0, 2
    %v180 = vld [vmem:[%s179] sm:$0x1]
    %181 = vrot.lane.b32.xlu0 %v180, 6
    %v182 = vpop.permute.xlu0 %181
    %vm183 = vcmask 72752
    %184 = vst.msk [vmem:[#allocation0] sm:$0x1] %vm183, %v182
    %s185 = scalar_lea.vmem %s0, 1
    %v186 = vld [vmem:[%s185] sm:$0x1]
    %187 = vrot.lane.b32.xlu0 %v186, 3
    %v188 = vpop.permute.xlu0 %187
    %vm189 = vcmask 48152
    %190 = vst.msk [vmem:[#allocation0] sm:$0x1] %vm189, %v188
    %s192 = sshllo.u32 0, 1
    %v194 = vld [vmem:[#allocation0] sm:%s192]
    %s195 = sshllo.u32 0, 1
    %196 = vst [vmem:[%s1] sm:%s195] %v194

// kernel: net_forward.1
$region0: #{net_forward.1}
  #allocation0 [shape = 'u32[]', space=smem, size = 0x4, offset = 0x4, fixed_abs, tag = 'smem constant byte address 0x4 - core index']
  #allocation1 [shape = 'u32[144,128]{1,0:T(1,128)}', space=vmem, size = 0x12000, scoped, tag = 'internal scratch']
  %s0 = inlined_call_operand.vmem [shape: f32[128,128], index: 0, kind: input, shape index: {}]
  %s1 = inlined_call_operand.vmem [shape: f32[1,128], index: 1, kind: input, shape index: {}]
  %s2 = inlined_call_operand.vmem [shape: f32[128,96], index: 2, kind: input, shape index: {}]
  %s3 = inlined_call_operand.vmem [shape: f32[1,96], index: 3, kind: input, shape index: {}]
  %s4 = inlined_call_operand.vmem [shape: f32[1,128], index: 4, kind: input, shape index: {}]
  %s5 = inlined_call_operand.vmem [shape: f32[1,96], index: 5, kind: output, shape index: {}]
  %s6 = sld [smem:[#allocation0]]
  $region30: #{net_forward.1} parent=0
    _
  %s8 = ssub.s32 1, %s6
  %s9 = scalar_select 0, %s8, %s6
  // Predicated region
  $region2: #{net_forward.1} parent=0 // pred_check
    _
  $region3: #{net_forward.1} parent=0 // pred_check_branch
    %11 = sbr.rel (0) target = $region5
  $region4: #{net_forward.1} parent=0 // pred_region
    _
  $region5: #{net_forward.1} parent=0 // pred_fallthru
    _
  // Predicated region
  $region6: #{net_forward.1} parent=0 // pred_check
    _
  $region7: #{net_forward.1} parent=0 // pred_check_branch
    %13 = sbr.rel (0) target = $region9
  $region8: #{net_forward.1} parent=0 // pred_region
    _
  $region9: #{net_forward.1} parent=0 // pred_fallthru
    _
  // Predicated region
  $region10: #{net_forward.1} parent=0 // pred_check
    _
  $region11: #{net_forward.1} parent=0 // pred_check_branch
    %15 = sbr.rel (0) target = $region13
  $region12: #{net_forward.1} parent=0 // pred_region
    _
  $region13: #{net_forward.1} parent=0 // pred_fallthru
    _
  // Predicated region
  $region14: #{net_forward.1} parent=0 // pred_check
    _
  $region15: #{net_forward.1} parent=0 // pred_check_branch
    %17 = sbr.rel (0) target = $region17
  $region16: #{net_forward.1} parent=0 // pred_region
    _
  $region17: #{net_forward.1} parent=0 // pred_fallthru
    _
  // Predicated region
  $region18: #{net_forward.1} parent=0 // pred_check
    _
  $region19: #{net_forward.1} parent=0 // pred_check_branch
    %19 = sbr.rel (0) target = $region21
  $region20: #{net_forward.1} parent=0 // pred_region
    _
  $region21: #{net_forward.1} parent=0 // pred_fallthru
    _
  %v20 = vld [vmem:[%s4] sm:$0x1]
  %v21 = vld [vmem:[%s0] sm:$0xff]
  %v22 = vld [vmem:[%s0 + $0x8] sm:$0xff]
  %v23 = vld [vmem:[%s0 + $0x10] sm:$0xff]
  %v24 = vld [vmem:[%s0 + $0x18] sm:$0xff]
  %v25 = vld [vmem:[%s0 + $0x20] sm:$0xff]
  %v26 = vld [vmem:[%s0 + $0x28] sm:$0xff]
  %v27 = vld [vmem:[%s0 + $0x30] sm:$0xff]
  %v28 = vld [vmem:[%s0 + $0x38] sm:$0xff]
  %v29 = vld [vmem:[%s0 + $0x40] sm:$0xff]
  %v30 = vld [vmem:[%s0 + $0x48] sm:$0xff]
  %v31 = vld [vmem:[%s0 + $0x50] sm:$0xff]
  %v32 = vld [vmem:[%s0 + $0x58] sm:$0xff]
  %v33 = vld [vmem:[%s0 + $0x60] sm:$0xff]
  %v34 = vld [vmem:[%s0 + $0x68] sm:$0xff]
  %v35 = vld [vmem:[%s0 + $0x70] sm:$0xff]
  %v36 = vld [vmem:[%s0 + $0x78] sm:$0xff]
  %v37 = vld [vmem:[%s1] sm:$0x1]
  %38 = vmatprep.subr.mxu0 0.0
  %39 = vmatpush1.msra.mxu0 %v21
  %40 = vmatprep.subr.mxu0 0.0
  %41 = vmatpush1.msra.mxu0 %v22
  %42 = vmatprep.subr.mxu0 0.0
  %43 = vmatpush1.msra.mxu0 %v23
  %44 = vmatprep.subr.mxu0 0.0
  %45 = vmatpush1.msra.mxu0 %v24
  %46 = vmatprep.subr.mxu0 0.0
  %47 = vmatpush1.msra.mxu0 %v25
  %48 = vmatprep.subr.mxu0 0.0
  %49 = vmatpush1.msra.mxu0 %v26
  %50 = vmatprep.subr.mxu0 0.0
  %51 = vmatpush1.msra.mxu0 %v27
  %52 = vmatprep.subr.mxu0 0.0
  %53 = vmatpush1.msra.mxu0 %v28
  %54 = vmatprep.subr.mxu0 0.0
  %55 = vmatpush1.msra.mxu0 %v29
  %56 = vmatprep.subr.mxu0 0.0
  %57 = vmatpush1.msra.mxu0 %v30
  %58 = vmatprep.subr.mxu0 0.0
  %59 = vmatpush1.msra.mxu0 %v31
  %60 = vmatprep.subr.mxu0 0.0
  %61 = vmatpush1.msra.mxu0 %v32
  %62 = vmatprep.subr.mxu0 0.0
  %63 = vmatpush1.msra.mxu0 %v33
  %64 = vmatprep.subr.mxu0 0.0
  %65 = vmatpush1.msra.mxu0 %v34
  %66 = vmatprep.subr.mxu0 0.0
  %67 = vmatpush1.msra.mxu0 %v35
  %68 = vmatprep.subr.mxu0 0.0
  %69 = vmatpush1.msra.mxu0 %v36
  %70 = vmatprep.subr.mxu0 0.0
  %71 = vmatpush1.msra.mxu0 0.0
  %72 = vmatprep.subr.mxu0 0.0
  %73 = vmatpush1.msra.mxu0 0.0
  %74 = vmatprep.subr.mxu0 0.0
  %75 = vmatpush1.msra.mxu0 0.0
  %76 = vmatprep.subr.mxu0 0.0
  %77 = vmatpush1.msra.mxu0 0.0
  %78 = vmatprep.subr.mxu0 0.0
  %79 = vmatpush1.msra.mxu0 0.0
  %80 = vmatprep.subr.mxu0 0.0
  %81 = vmatpush1.msra.mxu0 0.0
  %82 = vmatprep.subr.mxu0 0.0
  %83 = vmatpush1.msra.mxu0 0.0
  %84 = vmatprep.subr.mxu0 0.0
  %85 = vmatpush1.msra.mxu0 0.0
  %86 = vmatprep.subr.mxu0 0.0
  %87 = vmatpush1.msra.mxu0 0.0
  %88 = vmatprep.subr.mxu0 0.0
  %89 = vmatpush1.msra.mxu0 0.0
  %90 = vmatprep.subr.mxu0 0.0
  %91 = vmatpush1.msra.mxu0 0.0
  %92 = vmatprep.subr.mxu0 0.0
  %93 = vmatpush1.msra.mxu0 0.0
  %94 = vmatprep.subr.mxu0 0.0
  %95 = vmatpush1.msra.mxu0 0.0
  %96 = vmatprep.subr.mxu0 0.0
  %97 = vmatpush1.msra.mxu0 0.0
  %98 = vmatprep.subr.mxu0 0.0
  %99 = vmatpush1.msra.mxu0 0.0
  %100 = vmatprep.subr.mxu0 0.0
  %101 = vmatpush1.msra.mxu0 0.0
  %102 = vmatprep.mubr.f32.mxu0 0.0
  %103 = vmatmul.mubr.f32.gmra.mrb[0].mxu0 %v20
  %v104 = vpop.f32.mrb[0].mxu0
  %v105 = vadd.f32 %v37, %v104
  %v106 = vpop.f32.mrb[0].mxu0
  %107 = vdwg.mxu0
  %v108 = vmax.f32 %v105, 0.0
  %v109 = vld [vmem:[%s2] sm:$0xff]
  %v110 = vld [vmem:[%s2 + $0x8] sm:$0xff]
  %v111 = vld [vmem:[%s2 + $0x10] sm:$0xff]
  %v112 = vld [vmem:[%s2 + $0x18] sm:$0xff]
  %v113 = vld [vmem:[%s2 + $0x20] sm:$0xff]
  %v114 = vld [vmem:[%s2 + $0x28] sm:$0xff]
  %v115 = vld [vmem:[%s2 + $0x30] sm:$0xff]
  %v116 = vld [vmem:[%s2 + $0x38] sm:$0xff]
  %v117 = vld [vmem:[%s2 + $0x40] sm:$0xff]
  %v118 = vld [vmem:[%s2 + $0x48] sm:$0xff]
  %v119 = vld [vmem:[%s2 + $0x50] sm:$0xff]
  %v120 = vld [vmem:[%s2 + $0x58] sm:$0xff]
  %v121 = vld [vmem:[%s2 + $0x60] sm:$0xff]
  %v122 = vld [vmem:[%s2 + $0x68] sm:$0xff]
  %v123 = vld [vmem:[%s2 + $0x70] sm:$0xff]
  %v124 = vld [vmem:[%s2 + $0x78] sm:$0xff]
  %v125 = vld [vmem:[%s3] sm:$0x1]
  %126 = vmatprep.subr.mxu0 0.0
  %127 = vmatpush1.msra.mxu0 %v109
  %128 = vmatprep.subr.mxu0 0.0
  %129 = vmatpush1.msra.mxu0 %v110
  %130 = vmatprep.subr.mxu0 0.0
  %131 = vmatpush1.msra.mxu0 %v111
  %132 = vmatprep.subr.mxu0 0.0
  %133 = vmatpush1.msra.mxu0 %v112
  %134 = vmatprep.subr.mxu0 0.0
  %135 = vmatpush1.msra.mxu0 %v113
  %136 = vmatprep.subr.mxu0 0.0
  %137 = vmatpush1.msra.mxu0 %v114
  %138 = vmatprep.subr.mxu0 0.0
  %139 = vmatpush1.msra.mxu0 %v115
  %140 = vmatprep.subr.mxu0 0.0
  %141 = vmatpush1.msra.mxu0 %v116
  %142 = vmatprep.subr.mxu0 0.0
  %143 = vmatpush1.msra.mxu0 %v117
  %144 = vmatprep.subr.mxu0 0.0
  %145 = vmatpush1.msra.mxu0 %v118
  %146 = vmatprep.subr.mxu0 0.0
  %147 = vmatpush1.msra.mxu0 %v119
  %148 = vmatprep.subr.mxu0 0.0
  %149 = vmatpush1.msra.mxu0 %v120
  %150 = vmatprep.subr.mxu0 0.0
  %151 = vmatpush1.msra.mxu0 %v121
  %152 = vmatprep.subr.mxu0 0.0
  %153 = vmatpush1.msra.mxu0 %v122
  %154 = vmatprep.subr.mxu0 0.0
  %155 = vmatpush1.msra.mxu0 %v123
  %156 = vmatprep.subr.mxu0 0.0
  %157 = vmatpush1.msra.mxu0 %v124
  %158 = vmatprep.subr.mxu0 0.0
  %159 = vmatpush1.msra.mxu0 0.0
  %160 = vmatprep.subr.mxu0 0.0
  %161 = vmatpush1.msra.mxu0 0.0
  %162 = vmatprep.subr.mxu0 0.0
  %163 = vmatpush1.msra.mxu0 0.0
  %164 = vmatprep.subr.mxu0 0.0
  %165 = vmatpush1.msra.mxu0 0.0
  %166 = vmatprep.subr.mxu0 0.0
  %167 = vmatpush1.msra.mxu0 0.0
  %168 = vmatprep.subr.mxu0 0.0
  %169 = vmatpush1.msra.mxu0 0.0
  %170 = vmatprep.subr.mxu0 0.0
  %171 = vmatpush1.msra.mxu0 0.0
  %172 = vmatprep.subr.mxu0 0.0
  %173 = vmatpush1.msra.mxu0 0.0
  %174 = vmatprep.subr.mxu0 0.0
  %175 = vmatpush1.msra.mxu0 0.0
  %176 = vmatprep.subr.mxu0 0.0
  %177 = vmatpush1.msra.mxu0 0.0
  %178 = vmatprep.subr.mxu0 0.0
  %179 = vmatpush1.msra.mxu0 0.0
  %180 = vmatprep.subr.mxu0 0.0
  %181 = vmatpush1.msra.mxu0 0.0
  %182 = vmatprep.subr.mxu0 0.0
  %183 = vmatpush1.msra.mxu0 0.0
  %184 = vmatprep.subr.mxu0 0.0
  %185 = vmatpush1.msra.mxu0 0.0
  %186 = vmatprep.subr.mxu0 0.0
  %187 = vmatpush1.msra.mxu0 0.0
  %188 = vmatprep.subr.mxu0 0.0
  %189 = vmatpush1.msra.mxu0 0.0
  %190 = vmatprep.mubr.f32.mxu0 0.0
  %191 = vmatmul.mubr.f32.gmra.mrb[0].mxu0 %v108
  %v192 = vpop.f32.mrb[0].mxu0
  %v193 = vadd.f32 %v125, %v192
  %v194 = vpop.f32.mrb[0].mxu0
  %195 = vdwg.mxu0
  %vm196 = vcmask 778240
  %197 = vst.msk [vmem:[%s5] sm:$0x1] %vm196, %v193
  // Predicated region
  $region22: #{net_forward.1} parent=0 // pred_check
    _
  $region23: #{net_forward.1} parent=0 // pred_check_branch
    %199 = sbr.rel (0) target = $region25
  $region24: #{net_forward.1} parent=0 // pred_region
    _
  $region25: #{net_forward.1} parent=0 // pred_fallthru
    _
  // Predicated region
  $region26: #{net_forward.1} parent=0 // pred_check
    _
  $region27: #{net_forward.1} parent=0 // pred_check_branch
    %201 = sbr.rel (0) target = $region29
  $region28: #{net_forward.1} parent=0 // pred_region
    _
  $region29: #{net_forward.1} parent=0 // pred_fallthru
    _

</llo_original>
